<compile_context>
chip_gen: v7x
topology: tpu7x:2x2x1
jax: 0.10.0
libtpu: 0.0.40
codegen_flags: <defaults>
</compile_context>

<pallas_src>
import functools

import jax
import jax.numpy as jnp
import numpy as np
from jax import lax
from jax.experimental import pallas as pl
from jax.experimental.pallas import tpu as pltpu


def _res_block_kernel(x_ref, mask_ref, w1_ref, b1_ref, w2_ref, b2_ref, out_ref, *, W):
    # x_ref:    (NB, C, HW)   unpadded input images, spatial flattened into lanes
    # mask_ref: (9, 1, HW)    0/1 validity masks per tap (virtual zero padding)
    # w1_ref/w2_ref: (C, 9C)  im2col weights, columns ordered (tap k, c_in)
    # b1_ref/b2_ref: (C, 1)   biases (broadcast along lanes)
    # out_ref:  (NB, C, HW)
    NB, C, HW = out_ref.shape

    w1 = w1_ref[...]
    w2 = w2_ref[...]
    b1 = b1_ref[...]
    b2 = b2_ref[...]
    masks = mask_ref[...]            # (9, 1, HW)

    def im2col(v):                   # v: (C, HW) -> (9C, HW)
        slabs = []
        for k in range(9):
            dh, dw = k // 3, k % 3
            off = (dh - 1) * W + (dw - 1)        # flat source offset of this tap
            if off == 0:
                shifted = v
            else:
                # shifted[:, p] = v[:, (p + off) % HW]  (XLU lane rotate)
                shifted = pltpu.roll(v, shift=(-off) % HW, axis=1)
            slabs.append(shifted * masks[k])      # mask = virtual zero padding
        return jnp.concatenate(slabs, axis=0)     # (9C, HW)

    for nb in range(NB):             # NB is a small, static block of images
        x = x_ref[nb]                # (C, HW), lane-dense load
        h = jnp.dot(w1, im2col(x), preferred_element_type=jnp.float32) + b1
        h = jnp.maximum(h, 0.0)
        y = jnp.dot(w2, im2col(h), preferred_element_type=jnp.float32) + b2 + x
        out_ref[nb] = y.astype(out_ref.dtype)     # (C, HW): 256-lane dense store


def _tap_masks(H, W):
    """(9, 1, H*W) 0/1 masks: tap k valid where the padded-source pixel is in-bounds."""
    r = np.arange(H * W) // W
    c = np.arange(H * W) % W
    m = np.zeros((9, 1, H * W), np.float32)
    for k in range(9):
        dh, dw = k // 3, k % 3
        ok = ((r + dh - 1 >= 0) & (r + dh - 1 < H) &
              (c + dw - 1 >= 0) & (c + dw - 1 < W))
        m[k, 0] = ok.astype(np.float32)
    return m


def _pick_images_per_step(N, C, HW, vmem_budget_bytes=8 << 20, max_nb=8):
    # Rough f32 VMEM per image: double-buffered in/out blocks + one live 9C x HW slab.
    per_image = 4 * HW * C * (2 * 2 + 2 * 2 + 9)
    nb = max(1, min(N, max_nb, vmem_budget_bytes // max(per_image, 1)))
    while N % nb:
        nb -= 1
    return nb


def small_res_block(x_nchw, w1, b1, w2, b2):
    """SmallResBlock forward. x: (N, C, H, W); w*: (C, C, 3, 3); b*: (C,). Returns NCHW."""
    N, C, H, W = x_nchw.shape
    HW = H * W

    # Free layout plumbing: flatten spatial dims (contiguous reshape, no transpose, no pad).
    x_flat = x_nchw.reshape(N, C, HW).astype(jnp.float32)

    # (C_out, C_in, 3, 3) -> (C_out, 9*C_in), columns ordered (tap k = dh*3+dw, c_in).
    def w_mat(w):
        return jnp.transpose(w, (0, 2, 3, 1)).reshape(C, 9 * C).astype(jnp.float32)

    w1m, w2m = w_mat(w1), w_mat(w2)
    b1m = b1.reshape(C, 1).astype(jnp.float32)
    b2m = b2.reshape(C, 1).astype(jnp.float32)
    masks = jnp.asarray(_tap_masks(H, W))

    NB = _pick_images_per_step(N, C, HW)

    out_flat = pl.pallas_call(
        functools.partial(_res_block_kernel, W=W),
        out_shape=jax.ShapeDtypeStruct((N, C, HW), jnp.float32),
        grid_spec=pltpu.PrefetchScalarGridSpec(
            num_scalar_prefetch=0,
            grid=(N // NB,),
            in_specs=[
                pl.BlockSpec((NB, C, HW), lambda n: (n, 0, 0)),
                pl.BlockSpec((9, 1, HW), lambda n: (0, 0, 0)),
                pl.BlockSpec((C, 9 * C), lambda n: (0, 0)),
                pl.BlockSpec((C, 1), lambda n: (0, 0)),
                pl.BlockSpec((C, 9 * C), lambda n: (0, 0)),
                pl.BlockSpec((C, 1), lambda n: (0, 0)),
            ],
            out_specs=pl.BlockSpec((NB, C, HW), lambda n: (n, 0, 0)),
        ),
        compiler_params=pltpu.CompilerParams(
            dimension_semantics=("parallel",),
            vmem_limit_bytes=32 * 1024 * 1024,
        ),
    )(x_flat, masks, w1m, b1m, w2m, b2m)

    return out_flat.reshape(N, C, H, W)


def _reference(x_nchw, w1, b1, w2, b2):
    """Plain-JAX reference matching nn.Conv2d(padding=1) semantics (NCHW)."""
    dn = lax.conv_dimension_numbers(x_nchw.shape, w1.shape, ("NCHW", "OIHW", "NCHW"))
    out = lax.conv_general_dilated(x_nchw, w1, (1, 1), ((1, 1), (1, 1)), dimension_numbers=dn)
    out = out + b1[None, :, None, None]
    out = jnp.maximum(out, 0.0)
    out = lax.conv_general_dilated(out, w2, (1, 1), ((1, 1), (1, 1)), dimension_numbers=dn)
    out = out + b2[None, :, None, None]
    return out + x_nchw


if __name__ == "__main__":
    key = jax.random.PRNGKey(0)
    N, C, H, W = 2, 4, 16, 16
    kx, k1, kb1, k2, kb2 = jax.random.split(key, 5)

    x = jax.random.normal(kx, (N, C, H, W), dtype=jnp.float32)

    # Deterministic parameter init (uniform in [-bound, bound], like PyTorch fan-in init)
    fan_in = C * 3 * 3
    bound = 1.0 / (fan_in ** 0.5)
    w1 = jax.random.uniform(k1, (C, C, 3, 3), minval=-bound, maxval=bound, dtype=jnp.float32)
    b1 = jax.random.uniform(kb1, (C,), minval=-bound, maxval=bound, dtype=jnp.float32)
    w2 = jax.random.uniform(k2, (C, C, 3, 3), minval=-bound, maxval=bound, dtype=jnp.float32)
    b2 = jax.random.uniform(kb2, (C,), minval=-bound, maxval=bound, dtype=jnp.float32)

    out = jax.block_until_ready(small_res_block(x, w1, b1, w2, b2))
    ref = jax.block_until_ready(_reference(x, w1, b1, w2, b2))

    assert out.shape == (N, C, H, W)
    assert jnp.allclose(out, ref, atol=1e-4, rtol=1e-4), "mismatch vs reference conv"
    print("KERNEL_OK")
</pallas_src>

<mosaic_0001>
module attributes {stable_mosaic.version = 11 : i64} {
  func.func @_res_block_kernel(%arg0: i32, %arg1: memref<2x4x256xf32, #tpu.memory_space<vmem>>, %arg2: memref<9x1x256xf32, #tpu.memory_space<vmem>>, %arg3: memref<4x36xf32, #tpu.memory_space<vmem>>, %arg4: memref<4x1xf32, #tpu.memory_space<vmem>>, %arg5: memref<4x36xf32, #tpu.memory_space<vmem>>, %arg6: memref<4x1xf32, #tpu.memory_space<vmem>>, %arg7: memref<2x4x256xf32, #tpu.memory_space<vmem>>) attributes {dimension_semantics = [#tpu.dimension_semantics<parallel>], iteration_bounds = array<i64: 1>, scalar_prefetch = 0 : i64, scratch_operands = 0 : i64, tpu.core_type = #tpu.core_type<tc>, window_params = [{transform_indices = @transform_0, window_bounds = array<i64: 2, 4, 256>}, {pipeline_mode = #tpu.pipeline_mode<synchronous>, transform_indices = @transform_1, window_bounds = array<i64: 9, 1, 256>}, {pipeline_mode = #tpu.pipeline_mode<synchronous>, transform_indices = @transform_2, window_bounds = array<i64: 4, 36>}, {pipeline_mode = #tpu.pipeline_mode<synchronous>, transform_indices = @transform_3, window_bounds = array<i64: 4, 1>}, {pipeline_mode = #tpu.pipeline_mode<synchronous>, transform_indices = @transform_4, window_bounds = array<i64: 4, 36>}, {pipeline_mode = #tpu.pipeline_mode<synchronous>, transform_indices = @transform_5, window_bounds = array<i64: 4, 1>}, {transform_indices = @transform_6, window_bounds = array<i64: 2, 4, 256>}]} {
    %c0 = arith.constant 0 : index
    %c0_0 = arith.constant 0 : index
    %0 = vector.load %arg3[%c0, %c0_0] : memref<4x36xf32, #tpu.memory_space<vmem>>, vector<4x36xf32>
    %c0_1 = arith.constant 0 : index
    %c0_2 = arith.constant 0 : index
    %1 = vector.load %arg5[%c0_1, %c0_2] : memref<4x36xf32, #tpu.memory_space<vmem>>, vector<4x36xf32>
    %c0_3 = arith.constant 0 : index
    %c0_4 = arith.constant 0 : index
    %2 = vector.load %arg4[%c0_3, %c0_4] : memref<4x1xf32, #tpu.memory_space<vmem>>, vector<4x1xf32>
    %c0_5 = arith.constant 0 : index
    %c0_6 = arith.constant 0 : index
    %3 = vector.load %arg6[%c0_5, %c0_6] : memref<4x1xf32, #tpu.memory_space<vmem>>, vector<4x1xf32>
    %c0_7 = arith.constant 0 : index
    %c0_8 = arith.constant 0 : index
    %c0_9 = arith.constant 0 : index
    %4 = vector.load %arg2[%c0_7, %c0_8, %c0_9] : memref<9x1x256xf32, #tpu.memory_space<vmem>>, vector<9x1x256xf32>
    %c0_10 = arith.constant 0 : index
    %c0_11 = arith.constant 0 : index
    %c0_12 = arith.constant 0 : index
    %5 = vector.load %arg1[%c0_10, %c0_11, %c0_12] : memref<2x4x256xf32, #tpu.memory_space<vmem>>, vector<1x4x256xf32>
    %6 = vector.shape_cast %5 : vector<1x4x256xf32> to vector<4x256xf32>
    %c17_i32 = arith.constant 17 : i32
    %7 = tpu.dynamic_rotate %6 by %c17_i32 dim 1 : vector<4x256xf32>, i32 -> vector<4x256xf32>
    %8 = vector.extract_strided_slice %4 {offsets = [0, 0, 0], sizes = [1, 1, 256], strides = [1, 1, 1]} : vector<9x1x256xf32> to vector<1x1x256xf32>
    %9 = vector.shape_cast %8 : vector<1x1x256xf32> to vector<1x256xf32>
    %10 = vector.broadcast %9 : vector<1x256xf32> to vector<4x256xf32>
    %11 = arith.mulf %7, %10 : vector<4x256xf32>
    %c16_i32 = arith.constant 16 : i32
    %12 = tpu.dynamic_rotate %6 by %c16_i32 dim 1 : vector<4x256xf32>, i32 -> vector<4x256xf32>
    %13 = vector.extract_strided_slice %4 {offsets = [1, 0, 0], sizes = [1, 1, 256], strides = [1, 1, 1]} : vector<9x1x256xf32> to vector<1x1x256xf32>
    %14 = vector.shape_cast %13 : vector<1x1x256xf32> to vector<1x256xf32>
    %15 = vector.broadcast %14 : vector<1x256xf32> to vector<4x256xf32>
    %16 = arith.mulf %12, %15 : vector<4x256xf32>
    %c15_i32 = arith.constant 15 : i32
    %17 = tpu.dynamic_rotate %6 by %c15_i32 dim 1 : vector<4x256xf32>, i32 -> vector<4x256xf32>
    %18 = vector.extract_strided_slice %4 {offsets = [2, 0, 0], sizes = [1, 1, 256], strides = [1, 1, 1]} : vector<9x1x256xf32> to vector<1x1x256xf32>
    %19 = vector.shape_cast %18 : vector<1x1x256xf32> to vector<1x256xf32>
    %20 = vector.broadcast %19 : vector<1x256xf32> to vector<4x256xf32>
    %21 = arith.mulf %17, %20 : vector<4x256xf32>
    %c1_i32 = arith.constant 1 : i32
    %22 = tpu.dynamic_rotate %6 by %c1_i32 dim 1 : vector<4x256xf32>, i32 -> vector<4x256xf32>
    %23 = vector.extract_strided_slice %4 {offsets = [3, 0, 0], sizes = [1, 1, 256], strides = [1, 1, 1]} : vector<9x1x256xf32> to vector<1x1x256xf32>
    %24 = vector.shape_cast %23 : vector<1x1x256xf32> to vector<1x256xf32>
    %25 = vector.broadcast %24 : vector<1x256xf32> to vector<4x256xf32>
    %26 = arith.mulf %22, %25 : vector<4x256xf32>
    %27 = vector.extract_strided_slice %4 {offsets = [4, 0, 0], sizes = [1, 1, 256], strides = [1, 1, 1]} : vector<9x1x256xf32> to vector<1x1x256xf32>
    %28 = vector.shape_cast %27 : vector<1x1x256xf32> to vector<1x256xf32>
    %29 = vector.broadcast %28 : vector<1x256xf32> to vector<4x256xf32>
    %30 = arith.mulf %6, %29 : vector<4x256xf32>
    %c255_i32 = arith.constant 255 : i32
    %31 = tpu.dynamic_rotate %6 by %c255_i32 dim 1 : vector<4x256xf32>, i32 -> vector<4x256xf32>
    %32 = vector.extract_strided_slice %4 {offsets = [5, 0, 0], sizes = [1, 1, 256], strides = [1, 1, 1]} : vector<9x1x256xf32> to vector<1x1x256xf32>
    %33 = vector.shape_cast %32 : vector<1x1x256xf32> to vector<1x256xf32>
    %34 = vector.broadcast %33 : vector<1x256xf32> to vector<4x256xf32>
    %35 = arith.mulf %31, %34 : vector<4x256xf32>
    %c241_i32 = arith.constant 241 : i32
    %36 = tpu.dynamic_rotate %6 by %c241_i32 dim 1 : vector<4x256xf32>, i32 -> vector<4x256xf32>
    %37 = vector.extract_strided_slice %4 {offsets = [6, 0, 0], sizes = [1, 1, 256], strides = [1, 1, 1]} : vector<9x1x256xf32> to vector<1x1x256xf32>
    %38 = vector.shape_cast %37 : vector<1x1x256xf32> to vector<1x256xf32>
    %39 = vector.broadcast %38 : vector<1x256xf32> to vector<4x256xf32>
    %40 = arith.mulf %36, %39 : vector<4x256xf32>
    %c240_i32 = arith.constant 240 : i32
    %41 = tpu.dynamic_rotate %6 by %c240_i32 dim 1 : vector<4x256xf32>, i32 -> vector<4x256xf32>
    %42 = vector.extract_strided_slice %4 {offsets = [7, 0, 0], sizes = [1, 1, 256], strides = [1, 1, 1]} : vector<9x1x256xf32> to vector<1x1x256xf32>
    %43 = vector.shape_cast %42 : vector<1x1x256xf32> to vector<1x256xf32>
    %44 = vector.broadcast %43 : vector<1x256xf32> to vector<4x256xf32>
    %45 = arith.mulf %41, %44 : vector<4x256xf32>
    %c239_i32 = arith.constant 239 : i32
    %46 = tpu.dynamic_rotate %6 by %c239_i32 dim 1 : vector<4x256xf32>, i32 -> vector<4x256xf32>
    %47 = vector.extract_strided_slice %4 {offsets = [8, 0, 0], sizes = [1, 1, 256], strides = [1, 1, 1]} : vector<9x1x256xf32> to vector<1x1x256xf32>
    %48 = vector.shape_cast %47 : vector<1x1x256xf32> to vector<1x256xf32>
    %49 = vector.broadcast %48 : vector<1x256xf32> to vector<4x256xf32>
    %50 = arith.mulf %46, %49 : vector<4x256xf32>
    %51 = tpu.concatenate %11, %16, %21, %26, %30, %35, %40, %45, %50 in 0 : vector<4x256xf32>, vector<4x256xf32>, vector<4x256xf32>, vector<4x256xf32>, vector<4x256xf32>, vector<4x256xf32>, vector<4x256xf32>, vector<4x256xf32>, vector<4x256xf32> -> vector<36x256xf32>
    %cst = arith.constant dense<0.000000e+00> : vector<4x256xf32>
    %52 = tpu.matmul %0, %51, %cst {dimension_numbers = #tpu.dot_dimension_numbers<[1], [0], [0], [1], [0, 0, 1, 1], [], []>} : vector<4x36xf32>, vector<36x256xf32>, vector<4x256xf32> -> vector<4x256xf32>
    %53 = vector.broadcast %2 : vector<4x1xf32> to vector<4x256xf32>
    %54 = arith.addf %52, %53 : vector<4x256xf32>
    %cst_13 = arith.constant 0.000000e+00 : f32
    %55 = vector.broadcast %cst_13 : f32 to vector<4x256xf32>
    %56 = arith.maximumf %54, %55 : vector<4x256xf32>
    %c17_i32_14 = arith.constant 17 : i32
    %57 = tpu.dynamic_rotate %56 by %c17_i32_14 dim 1 : vector<4x256xf32>, i32 -> vector<4x256xf32>
    %58 = vector.extract_strided_slice %4 {offsets = [0, 0, 0], sizes = [1, 1, 256], strides = [1, 1, 1]} : vector<9x1x256xf32> to vector<1x1x256xf32>
    %59 = vector.shape_cast %58 : vector<1x1x256xf32> to vector<1x256xf32>
    %60 = vector.broadcast %59 : vector<1x256xf32> to vector<4x256xf32>
    %61 = arith.mulf %57, %60 : vector<4x256xf32>
    %c16_i32_15 = arith.constant 16 : i32
    %62 = tpu.dynamic_rotate %56 by %c16_i32_15 dim 1 : vector<4x256xf32>, i32 -> vector<4x256xf32>
    %63 = vector.extract_strided_slice %4 {offsets = [1, 0, 0], sizes = [1, 1, 256], strides = [1, 1, 1]} : vector<9x1x256xf32> to vector<1x1x256xf32>
    %64 = vector.shape_cast %63 : vector<1x1x256xf32> to vector<1x256xf32>
    %65 = vector.broadcast %64 : vector<1x256xf32> to vector<4x256xf32>
    %66 = arith.mulf %62, %65 : vector<4x256xf32>
    %c15_i32_16 = arith.constant 15 : i32
    %67 = tpu.dynamic_rotate %56 by %c15_i32_16 dim 1 : vector<4x256xf32>, i32 -> vector<4x256xf32>
    %68 = vector.extract_strided_slice %4 {offsets = [2, 0, 0], sizes = [1, 1, 256], strides = [1, 1, 1]} : vector<9x1x256xf32> to vector<1x1x256xf32>
    %69 = vector.shape_cast %68 : vector<1x1x256xf32> to vector<1x256xf32>
    %70 = vector.broadcast %69 : vector<1x256xf32> to vector<4x256xf32>
    %71 = arith.mulf %67, %70 : vector<4x256xf32>
    %c1_i32_17 = arith.constant 1 : i32
    %72 = tpu.dynamic_rotate %56 by %c1_i32_17 dim 1 : vector<4x256xf32>, i32 -> vector<4x256xf32>
    %73 = vector.extract_strided_slice %4 {offsets = [3, 0, 0], sizes = [1, 1, 256], strides = [1, 1, 1]} : vector<9x1x256xf32> to vector<1x1x256xf32>
    %74 = vector.shape_cast %73 : vector<1x1x256xf32> to vector<1x256xf32>
    %75 = vector.broadcast %74 : vector<1x256xf32> to vector<4x256xf32>
    %76 = arith.mulf %72, %75 : vector<4x256xf32>
    %77 = vector.extract_strided_slice %4 {offsets = [4, 0, 0], sizes = [1, 1, 256], strides = [1, 1, 1]} : vector<9x1x256xf32> to vector<1x1x256xf32>
    %78 = vector.shape_cast %77 : vector<1x1x256xf32> to vector<1x256xf32>
    %79 = vector.broadcast %78 : vector<1x256xf32> to vector<4x256xf32>
    %80 = arith.mulf %56, %79 : vector<4x256xf32>
    %c255_i32_18 = arith.constant 255 : i32
    %81 = tpu.dynamic_rotate %56 by %c255_i32_18 dim 1 : vector<4x256xf32>, i32 -> vector<4x256xf32>
    %82 = vector.extract_strided_slice %4 {offsets = [5, 0, 0], sizes = [1, 1, 256], strides = [1, 1, 1]} : vector<9x1x256xf32> to vector<1x1x256xf32>
    %83 = vector.shape_cast %82 : vector<1x1x256xf32> to vector<1x256xf32>
    %84 = vector.broadcast %83 : vector<1x256xf32> to vector<4x256xf32>
    %85 = arith.mulf %81, %84 : vector<4x256xf32>
    %c241_i32_19 = arith.constant 241 : i32
    %86 = tpu.dynamic_rotate %56 by %c241_i32_19 dim 1 : vector<4x256xf32>, i32 -> vector<4x256xf32>
    %87 = vector.extract_strided_slice %4 {offsets = [6, 0, 0], sizes = [1, 1, 256], strides = [1, 1, 1]} : vector<9x1x256xf32> to vector<1x1x256xf32>
    %88 = vector.shape_cast %87 : vector<1x1x256xf32> to vector<1x256xf32>
    %89 = vector.broadcast %88 : vector<1x256xf32> to vector<4x256xf32>
    %90 = arith.mulf %86, %89 : vector<4x256xf32>
    %c240_i32_20 = arith.constant 240 : i32
    %91 = tpu.dynamic_rotate %56 by %c240_i32_20 dim 1 : vector<4x256xf32>, i32 -> vector<4x256xf32>
    %92 = vector.extract_strided_slice %4 {offsets = [7, 0, 0], sizes = [1, 1, 256], strides = [1, 1, 1]} : vector<9x1x256xf32> to vector<1x1x256xf32>
    %93 = vector.shape_cast %92 : vector<1x1x256xf32> to vector<1x256xf32>
    %94 = vector.broadcast %93 : vector<1x256xf32> to vector<4x256xf32>
    %95 = arith.mulf %91, %94 : vector<4x256xf32>
    %c239_i32_21 = arith.constant 239 : i32
    %96 = tpu.dynamic_rotate %56 by %c239_i32_21 dim 1 : vector<4x256xf32>, i32 -> vector<4x256xf32>
    %97 = vector.extract_strided_slice %4 {offsets = [8, 0, 0], sizes = [1, 1, 256], strides = [1, 1, 1]} : vector<9x1x256xf32> to vector<1x1x256xf32>
    %98 = vector.shape_cast %97 : vector<1x1x256xf32> to vector<1x256xf32>
    %99 = vector.broadcast %98 : vector<1x256xf32> to vector<4x256xf32>
    %100 = arith.mulf %96, %99 : vector<4x256xf32>
    %101 = tpu.concatenate %61, %66, %71, %76, %80, %85, %90, %95, %100 in 0 : vector<4x256xf32>, vector<4x256xf32>, vector<4x256xf32>, vector<4x256xf32>, vector<4x256xf32>, vector<4x256xf32>, vector<4x256xf32>, vector<4x256xf32>, vector<4x256xf32> -> vector<36x256xf32>
    %cst_22 = arith.constant dense<0.000000e+00> : vector<4x256xf32>
    %102 = tpu.matmul %1, %101, %cst_22 {dimension_numbers = #tpu.dot_dimension_numbers<[1], [0], [0], [1], [0, 0, 1, 1], [], []>} : vector<4x36xf32>, vector<36x256xf32>, vector<4x256xf32> -> vector<4x256xf32>
    %103 = vector.broadcast %3 : vector<4x1xf32> to vector<4x256xf32>
    %104 = arith.addf %102, %103 : vector<4x256xf32>
    %105 = arith.addf %104, %6 : vector<4x256xf32>
    %c0_23 = arith.constant 0 : index
    %c0_24 = arith.constant 0 : index
    %c0_25 = arith.constant 0 : index
    %106 = vector.load %arg7[%c0_23, %c0_24, %c0_25] : memref<2x4x256xf32, #tpu.memory_space<vmem>>, vector<1x4x256xf32>
    %107 = vector.shape_cast %106 : vector<1x4x256xf32> to vector<4x256xf32>
    %108 = vector.shape_cast %105 : vector<4x256xf32> to vector<1x4x256xf32>
    tpu.vector_store %arg7[%c0_23, %c0_24, %c0_25], %108 {strides = array<i32>} : memref<2x4x256xf32, #tpu.memory_space<vmem>>, vector<1x4x256xf32>,
    %c1 = arith.constant 1 : index
    %c0_26 = arith.constant 0 : index
    %c0_27 = arith.constant 0 : index
    %109 = vector.load %arg1[%c1, %c0_26, %c0_27] : memref<2x4x256xf32, #tpu.memory_space<vmem>>, vector<1x4x256xf32>
    %110 = vector.shape_cast %109 : vector<1x4x256xf32> to vector<4x256xf32>
    %c17_i32_28 = arith.constant 17 : i32
    %111 = tpu.dynamic_rotate %110 by %c17_i32_28 dim 1 : vector<4x256xf32>, i32 -> vector<4x256xf32>
    %112 = vector.extract_strided_slice %4 {offsets = [0, 0, 0], sizes = [1, 1, 256], strides = [1, 1, 1]} : vector<9x1x256xf32> to vector<1x1x256xf32>
    %113 = vector.shape_cast %112 : vector<1x1x256xf32> to vector<1x256xf32>
    %114 = vector.broadcast %113 : vector<1x256xf32> to vector<4x256xf32>
    %115 = arith.mulf %111, %114 : vector<4x256xf32>
    %c16_i32_29 = arith.constant 16 : i32
    %116 = tpu.dynamic_rotate %110 by %c16_i32_29 dim 1 : vector<4x256xf32>, i32 -> vector<4x256xf32>
    %117 = vector.extract_strided_slice %4 {offsets = [1, 0, 0], sizes = [1, 1, 256], strides = [1, 1, 1]} : vector<9x1x256xf32> to vector<1x1x256xf32>
    %118 = vector.shape_cast %117 : vector<1x1x256xf32> to vector<1x256xf32>
    %119 = vector.broadcast %118 : vector<1x256xf32> to vector<4x256xf32>
    %120 = arith.mulf %116, %119 : vector<4x256xf32>
    %c15_i32_30 = arith.constant 15 : i32
    %121 = tpu.dynamic_rotate %110 by %c15_i32_30 dim 1 : vector<4x256xf32>, i32 -> vector<4x256xf32>
    %122 = vector.extract_strided_slice %4 {offsets = [2, 0, 0], sizes = [1, 1, 256], strides = [1, 1, 1]} : vector<9x1x256xf32> to vector<1x1x256xf32>
    %123 = vector.shape_cast %122 : vector<1x1x256xf32> to vector<1x256xf32>
    %124 = vector.broadcast %123 : vector<1x256xf32> to vector<4x256xf32>
    %125 = arith.mulf %121, %124 : vector<4x256xf32>
    %c1_i32_31 = arith.constant 1 : i32
    %126 = tpu.dynamic_rotate %110 by %c1_i32_31 dim 1 : vector<4x256xf32>, i32 -> vector<4x256xf32>
    %127 = vector.extract_strided_slice %4 {offsets = [3, 0, 0], sizes = [1, 1, 256], strides = [1, 1, 1]} : vector<9x1x256xf32> to vector<1x1x256xf32>
    %128 = vector.shape_cast %127 : vector<1x1x256xf32> to vector<1x256xf32>
    %129 = vector.broadcast %128 : vector<1x256xf32> to vector<4x256xf32>
    %130 = arith.mulf %126, %129 : vector<4x256xf32>
    %131 = vector.extract_strided_slice %4 {offsets = [4, 0, 0], sizes = [1, 1, 256], strides = [1, 1, 1]} : vector<9x1x256xf32> to vector<1x1x256xf32>
    %132 = vector.shape_cast %131 : vector<1x1x256xf32> to vector<1x256xf32>
    %133 = vector.broadcast %132 : vector<1x256xf32> to vector<4x256xf32>
    %134 = arith.mulf %110, %133 : vector<4x256xf32>
    %c255_i32_32 = arith.constant 255 : i32
    %135 = tpu.dynamic_rotate %110 by %c255_i32_32 dim 1 : vector<4x256xf32>, i32 -> vector<4x256xf32>
    %136 = vector.extract_strided_slice %4 {offsets = [5, 0, 0], sizes = [1, 1, 256], strides = [1, 1, 1]} : vector<9x1x256xf32> to vector<1x1x256xf32>
    %137 = vector.shape_cast %136 : vector<1x1x256xf32> to vector<1x256xf32>
    %138 = vector.broadcast %137 : vector<1x256xf32> to vector<4x256xf32>
    %139 = arith.mulf %135, %138 : vector<4x256xf32>
    %c241_i32_33 = arith.constant 241 : i32
    %140 = tpu.dynamic_rotate %110 by %c241_i32_33 dim 1 : vector<4x256xf32>, i32 -> vector<4x256xf32>
    %141 = vector.extract_strided_slice %4 {offsets = [6, 0, 0], sizes = [1, 1, 256], strides = [1, 1, 1]} : vector<9x1x256xf32> to vector<1x1x256xf32>
    %142 = vector.shape_cast %141 : vector<1x1x256xf32> to vector<1x256xf32>
    %143 = vector.broadcast %142 : vector<1x256xf32> to vector<4x256xf32>
    %144 = arith.mulf %140, %143 : vector<4x256xf32>
    %c240_i32_34 = arith.constant 240 : i32
    %145 = tpu.dynamic_rotate %110 by %c240_i32_34 dim 1 : vector<4x256xf32>, i32 -> vector<4x256xf32>
    %146 = vector.extract_strided_slice %4 {offsets = [7, 0, 0], sizes = [1, 1, 256], strides = [1, 1, 1]} : vector<9x1x256xf32> to vector<1x1x256xf32>
    %147 = vector.shape_cast %146 : vector<1x1x256xf32> to vector<1x256xf32>
    %148 = vector.broadcast %147 : vector<1x256xf32> to vector<4x256xf32>
    %149 = arith.mulf %145, %148 : vector<4x256xf32>
    %c239_i32_35 = arith.constant 239 : i32
    %150 = tpu.dynamic_rotate %110 by %c239_i32_35 dim 1 : vector<4x256xf32>, i32 -> vector<4x256xf32>
    %151 = vector.extract_strided_slice %4 {offsets = [8, 0, 0], sizes = [1, 1, 256], strides = [1, 1, 1]} : vector<9x1x256xf32> to vector<1x1x256xf32>
    %152 = vector.shape_cast %151 : vector<1x1x256xf32> to vector<1x256xf32>
    %153 = vector.broadcast %152 : vector<1x256xf32> to vector<4x256xf32>
    %154 = arith.mulf %150, %153 : vector<4x256xf32>
    %155 = tpu.concatenate %115, %120, %125, %130, %134, %139, %144, %149, %154 in 0 : vector<4x256xf32>, vector<4x256xf32>, vector<4x256xf32>, vector<4x256xf32>, vector<4x256xf32>, vector<4x256xf32>, vector<4x256xf32>, vector<4x256xf32>, vector<4x256xf32> -> vector<36x256xf32>
    %cst_36 = arith.constant dense<0.000000e+00> : vector<4x256xf32>
    %156 = tpu.matmul %0, %155, %cst_36 {dimension_numbers = #tpu.dot_dimension_numbers<[1], [0], [0], [1], [0, 0, 1, 1], [], []>} : vector<4x36xf32>, vector<36x256xf32>, vector<4x256xf32> -> vector<4x256xf32>
    %157 = vector.broadcast %2 : vector<4x1xf32> to vector<4x256xf32>
    %158 = arith.addf %156, %157 : vector<4x256xf32>
    %cst_37 = arith.constant 0.000000e+00 : f32
    %159 = vector.broadcast %cst_37 : f32 to vector<4x256xf32>
    %160 = arith.maximumf %158, %159 : vector<4x256xf32>
    %c17_i32_38 = arith.constant 17 : i32
    %161 = tpu.dynamic_rotate %160 by %c17_i32_38 dim 1 : vector<4x256xf32>, i32 -> vector<4x256xf32>
    %162 = vector.extract_strided_slice %4 {offsets = [0, 0, 0], sizes = [1, 1, 256], strides = [1, 1, 1]} : vector<9x1x256xf32> to vector<1x1x256xf32>
    %163 = vector.shape_cast %162 : vector<1x1x256xf32> to vector<1x256xf32>
    %164 = vector.broadcast %163 : vector<1x256xf32> to vector<4x256xf32>
    %165 = arith.mulf %161, %164 : vector<4x256xf32>
    %c16_i32_39 = arith.constant 16 : i32
    %166 = tpu.dynamic_rotate %160 by %c16_i32_39 dim 1 : vector<4x256xf32>, i32 -> vector<4x256xf32>
    %167 = vector.extract_strided_slice %4 {offsets = [1, 0, 0], sizes = [1, 1, 256], strides = [1, 1, 1]} : vector<9x1x256xf32> to vector<1x1x256xf32>
    %168 = vector.shape_cast %167 : vector<1x1x256xf32> to vector<1x256xf32>
    %169 = vector.broadcast %168 : vector<1x256xf32> to vector<4x256xf32>
    %170 = arith.mulf %166, %169 : vector<4x256xf32>
    %c15_i32_40 = arith.constant 15 : i32
    %171 = tpu.dynamic_rotate %160 by %c15_i32_40 dim 1 : vector<4x256xf32>, i32 -> vector<4x256xf32>
    %172 = vector.extract_strided_slice %4 {offsets = [2, 0, 0], sizes = [1, 1, 256], strides = [1, 1, 1]} : vector<9x1x256xf32> to vector<1x1x256xf32>
    %173 = vector.shape_cast %172 : vector<1x1x256xf32> to vector<1x256xf32>
    %174 = vector.broadcast %173 : vector<1x256xf32> to vector<4x256xf32>
    %175 = arith.mulf %171, %174 : vector<4x256xf32>
    %c1_i32_41 = arith.constant 1 : i32
    %176 = tpu.dynamic_rotate %160 by %c1_i32_41 dim 1 : vector<4x256xf32>, i32 -> vector<4x256xf32>
    %177 = vector.extract_strided_slice %4 {offsets = [3, 0, 0], sizes = [1, 1, 256], strides = [1, 1, 1]} : vector<9x1x256xf32> to vector<1x1x256xf32>
    %178 = vector.shape_cast %177 : vector<1x1x256xf32> to vector<1x256xf32>
    %179 = vector.broadcast %178 : vector<1x256xf32> to vector<4x256xf32>
    %180 = arith.mulf %176, %179 : vector<4x256xf32>
    %181 = vector.extract_strided_slice %4 {offsets = [4, 0, 0], sizes = [1, 1, 256], strides = [1, 1, 1]} : vector<9x1x256xf32> to vector<1x1x256xf32>
    %182 = vector.shape_cast %181 : vector<1x1x256xf32> to vector<1x256xf32>
    %183 = vector.broadcast %182 : vector<1x256xf32> to vector<4x256xf32>
    %184 = arith.mulf %160, %183 : vector<4x256xf32>
    %c255_i32_42 = arith.constant 255 : i32
    %185 = tpu.dynamic_rotate %160 by %c255_i32_42 dim 1 : vector<4x256xf32>, i32 -> vector<4x256xf32>
    %186 = vector.extract_strided_slice %4 {offsets = [5, 0, 0], sizes = [1, 1, 256], strides = [1, 1, 1]} : vector<9x1x256xf32> to vector<1x1x256xf32>
    %187 = vector.shape_cast %186 : vector<1x1x256xf32> to vector<1x256xf32>
    %188 = vector.broadcast %187 : vector<1x256xf32> to vector<4x256xf32>
    %189 = arith.mulf %185, %188 : vector<4x256xf32>
    %c241_i32_43 = arith.constant 241 : i32
    %190 = tpu.dynamic_rotate %160 by %c241_i32_43 dim 1 : vector<4x256xf32>, i32 -> vector<4x256xf32>
    %191 = vector.extract_strided_slice %4 {offsets = [6, 0, 0], sizes = [1, 1, 256], strides = [1, 1, 1]} : vector<9x1x256xf32> to vector<1x1x256xf32>
    %192 = vector.shape_cast %191 : vector<1x1x256xf32> to vector<1x256xf32>
    %193 = vector.broadcast %192 : vector<1x256xf32> to vector<4x256xf32>
    %194 = arith.mulf %190, %193 : vector<4x256xf32>
    %c240_i32_44 = arith.constant 240 : i32
    %195 = tpu.dynamic_rotate %160 by %c240_i32_44 dim 1 : vector<4x256xf32>, i32 -> vector<4x256xf32>
    %196 = vector.extract_strided_slice %4 {offsets = [7, 0, 0], sizes = [1, 1, 256], strides = [1, 1, 1]} : vector<9x1x256xf32> to vector<1x1x256xf32>
    %197 = vector.shape_cast %196 : vector<1x1x256xf32> to vector<1x256xf32>
    %198 = vector.broadcast %197 : vector<1x256xf32> to vector<4x256xf32>
    %199 = arith.mulf %195, %198 : vector<4x256xf32>
    %c239_i32_45 = arith.constant 239 : i32
    %200 = tpu.dynamic_rotate %160 by %c239_i32_45 dim 1 : vector<4x256xf32>, i32 -> vector<4x256xf32>
    %201 = vector.extract_strided_slice %4 {offsets = [8, 0, 0], sizes = [1, 1, 256], strides = [1, 1, 1]} : vector<9x1x256xf32> to vector<1x1x256xf32>
    %202 = vector.shape_cast %201 : vector<1x1x256xf32> to vector<1x256xf32>
    %203 = vector.broadcast %202 : vector<1x256xf32> to vector<4x256xf32>
    %204 = arith.mulf %200, %203 : vector<4x256xf32>
    %205 = tpu.concatenate %165, %170, %175, %180, %184, %189, %194, %199, %204 in 0 : vector<4x256xf32>, vector<4x256xf32>, vector<4x256xf32>, vector<4x256xf32>, vector<4x256xf32>, vector<4x256xf32>, vector<4x256xf32>, vector<4x256xf32>, vector<4x256xf32> -> vector<36x256xf32>
    %cst_46 = arith.constant dense<0.000000e+00> : vector<4x256xf32>
    %206 = tpu.matmul %1, %205, %cst_46 {dimension_numbers = #tpu.dot_dimension_numbers<[1], [0], [0], [1], [0, 0, 1, 1], [], []>} : vector<4x36xf32>, vector<36x256xf32>, vector<4x256xf32> -> vector<4x256xf32>
    %207 = vector.broadcast %3 : vector<4x1xf32> to vector<4x256xf32>
    %208 = arith.addf %206, %207 : vector<4x256xf32>
    %209 = arith.addf %208, %110 : vector<4x256xf32>
    %c1_47 = arith.constant 1 : index
    %c0_48 = arith.constant 0 : index
    %c0_49 = arith.constant 0 : index
    %210 = vector.load %arg7[%c1_47, %c0_48, %c0_49] : memref<2x4x256xf32, #tpu.memory_space<vmem>>, vector<1x4x256xf32>
    %211 = vector.shape_cast %210 : vector<1x4x256xf32> to vector<4x256xf32>
    %212 = vector.shape_cast %209 : vector<4x256xf32> to vector<1x4x256xf32>
    tpu.vector_store %arg7[%c1_47, %c0_48, %c0_49], %212 {strides = array<i32>} : memref<2x4x256xf32, #tpu.memory_space<vmem>>, vector<1x4x256xf32>,
    return
  }
  func.func @transform_0(%arg0: i32) -> (i32, i32, i32) {
    %c0_i32 = arith.constant 0 : i32
    %c0_i32_0 = arith.constant 0 : i32
    %c0_i32_1 = arith.constant 0 : i32
    return %arg0, %c0_i32, %c0_i32_0 : i32, i32, i32
  }
  func.func @transform_1(%arg0: i32) -> (i32, i32, i32) {
    %c0_i32 = arith.constant 0 : i32
    %c0_i32_0 = arith.constant 0 : i32
    %c0_i32_1 = arith.constant 0 : i32
    %c0_i32_2 = arith.constant 0 : i32
    return %c0_i32, %c0_i32_0, %c0_i32_1 : i32, i32, i32
  }
  func.func @transform_2(%arg0: i32) -> (i32, i32) {
    %c0_i32 = arith.constant 0 : i32
    %c0_i32_0 = arith.constant 0 : i32
    %c0_i32_1 = arith.constant 0 : i32
    return %c0_i32, %c0_i32_0 : i32, i32
  }
  func.func @transform_3(%arg0: i32) -> (i32, i32) {
    %c0_i32 = arith.constant 0 : i32
    %c0_i32_0 = arith.constant 0 : i32
    %c0_i32_1 = arith.constant 0 : i32
    return %c0_i32, %c0_i32_0 : i32, i32
  }
  func.func @transform_4(%arg0: i32) -> (i32, i32) {
    %c0_i32 = arith.constant 0 : i32
    %c0_i32_0 = arith.constant 0 : i32
    %c0_i32_1 = arith.constant 0 : i32
    return %c0_i32, %c0_i32_0 : i32, i32
  }
  func.func @transform_5(%arg0: i32) -> (i32, i32) {
    %c0_i32 = arith.constant 0 : i32
    %c0_i32_0 = arith.constant 0 : i32
    %c0_i32_1 = arith.constant 0 : i32
    return %c0_i32, %c0_i32_0 : i32, i32
  }
  func.func @transform_6(%arg0: i32) -> (i32, i32, i32) {
    %c0_i32 = arith.constant 0 : i32
    %c0_i32_0 = arith.constant 0 : i32
    %c0_i32_1 = arith.constant 0 : i32
    return %arg0, %c0_i32, %c0_i32_0 : i32, i32, i32
  }
}

</mosaic_0001>

<llo_original>
// kernel: tpu_custom_call.1
$region0: #{tpu_custom_call.1}
  #allocation0 [shape = 'u32[]', space=smem, size = 0x4, offset = 0x4, fixed_abs, tag = 'smem constant byte address 0x4 - core index']
  #allocation1 [shape = 'u32[144,128]{1,0:T(1,128)}', space=vmem, size = 0x12000, scoped, tag = 'internal scratch']
  %s0 = inlined_call_operand.hbm [shape: f32[2,4,256], index: 0, kind: input, shape index: {}]
  %s1 = inlined_call_operand.hbm [shape: f32[9,1,256], index: 1, kind: input, shape index: {}]
  %s2 = inlined_call_operand.vmem [shape: f32[4,36], index: 2, kind: input, shape index: {}]
  %s3 = inlined_call_operand.vmem [shape: f32[4,1], index: 3, kind: input, shape index: {}]
  %s4 = inlined_call_operand.vmem [shape: f32[4,36], index: 4, kind: input, shape index: {}]
  %s5 = inlined_call_operand.vmem [shape: f32[4,1], index: 5, kind: input, shape index: {}]
  %s6 = inlined_call_operand.hbm [shape: f32[2,4,256], index: 6, kind: output, shape index: {}]
  %s7 = sld [smem:[#allocation0]]
  $region42: #{tpu_custom_call.1} parent=0
    _
  %s9 = ssub.s32 1, %s7
  %s10 = scalar_select 0, %s9, %s7
  $region1: #{tpu_custom_call.1} parent=0
    #allocation2 [shape = 'u8[8192]{0}', space=vmem, size = 0x2000, scoped, tag = 'input window, operand 0, single buffered']
    #allocation3 [shape = 's32[1]{0}', space=sflag, size = 0x4, scoped, tag = 'scoped memory for tpu_custom_call.1']
    #allocation4 [shape = 's32[1]{0}', space=sflag, size = 0x4, scoped, tag = 'scoped memory for tpu_custom_call.1']
    #allocation5 [shape = 'u8[9216]{0}', space=vmem, size = 0x2400, scoped, tag = 'input window, operand 1, single buffered']
    #allocation6 [shape = 's32[1]{0}', space=sflag, size = 0x4, scoped, tag = 'scoped memory for tpu_custom_call.1']
    #allocation7 [shape = 'u8[8192]{0}', space=vmem, size = 0x2000, scoped, tag = 'output window, operand 0, single buffered']
    %11 = vsyncpa [#allocation3], 0
    %12 = vsyncpa [#allocation6], 0
    %13 = vsyncpa [#allocation4], 0
    // Predicated region
    $region2: #{tpu_custom_call.1} parent=1 // pred_check
      _
    $region3: #{tpu_custom_call.1} parent=1 // pred_check_branch
      %15 = sbr.rel (0) target = $region5
    $region4: #{tpu_custom_call.1} parent=1 // pred_region
      %s17 = ssub.s32 256, 256
      %18 = vsyncadd [#allocation3], %s17
      %s19 = sshll.u32 [#allocation2], 4
      %s20 = int_to_ptr.vmem [resolvable:$true] %s19
      %25 = dma.hbm_to_vmem [thread:$0]  %s0, 256, %s20, [#allocation3], 128, 128, 8
    $region5: #{tpu_custom_call.1} parent=1 // pred_fallthru
      _
    // Predicated region
    $region6: #{tpu_custom_call.1} parent=1 // pred_check
      _
    $region7: #{tpu_custom_call.1} parent=1 // pred_check_branch
      %27 = sbr.rel (0) target = $region9
    $region8: #{tpu_custom_call.1} parent=1 // pred_region
      %s29 = ssub.s32 288, 288
      %30 = vsyncadd [#allocation6], %s29
      %s31 = sshll.u32 [#allocation5], 4
      %s32 = int_to_ptr.vmem [resolvable:$true] %s31
      %37 = dma.hbm_to_vmem [thread:$0]  %s1, 288, %s32, [#allocation6], 32, 32, 2
    $region9: #{tpu_custom_call.1} parent=1 // pred_fallthru
      _
    // Predicated region
    $region10: #{tpu_custom_call.1} parent=1 // pred_check
      _
    $region11: #{tpu_custom_call.1} parent=1 // pred_check_branch
      %39 = sbr.rel (0) target = $region13
    $region12: #{tpu_custom_call.1} parent=1 // pred_region
      _
    $region13: #{tpu_custom_call.1} parent=1 // pred_fallthru
      _
    // Predicated region
    $region14: #{tpu_custom_call.1} parent=1 // pred_check
      _
    $region15: #{tpu_custom_call.1} parent=1 // pred_check_branch
      %41 = sbr.rel (0) target = $region17
    $region16: #{tpu_custom_call.1} parent=1 // pred_region
      _
    $region17: #{tpu_custom_call.1} parent=1 // pred_fallthru
      _
    // Predicated region
    $region18: #{tpu_custom_call.1} parent=1 // pred_check
      _
    $region19: #{tpu_custom_call.1} parent=1 // pred_check_branch
      %43 = sbr.rel (0) target = $region21
    $region20: #{tpu_custom_call.1} parent=1 // pred_region
      _
    $region21: #{tpu_custom_call.1} parent=1 // pred_fallthru
      _
    // Predicated region
    $region22: #{tpu_custom_call.1} parent=1 // pred_check
      _
    $region23: #{tpu_custom_call.1} parent=1 // pred_check_branch
      %45 = sbr.rel (0) target = $region25
    $region24: #{tpu_custom_call.1} parent=1 // pred_region
      _
    $region25: #{tpu_custom_call.1} parent=1 // pred_fallthru
      _
    // Predicated region
    $region26: #{tpu_custom_call.1} parent=1 // pred_check
      _
    $region27: #{tpu_custom_call.1} parent=1 // pred_check_branch
      %47 = sbr.rel (0) target = $region29
    $region28: #{tpu_custom_call.1} parent=1 // pred_region
      %48 = dma.done [#allocation3], 256
    $region29: #{tpu_custom_call.1} parent=1 // pred_fallthru
      _
    // Predicated region
    $region30: #{tpu_custom_call.1} parent=1 // pred_check
      _
    $region31: #{tpu_custom_call.1} parent=1 // pred_check_branch
      %50 = sbr.rel (0) target = $region33
    $region32: #{tpu_custom_call.1} parent=1 // pred_region
      %51 = dma.done [#allocation6], 288
    $region33: #{tpu_custom_call.1} parent=1 // pred_fallthru
      _
    %v52 = vld [vmem:[%s2] sm:$0xf]
    %v53 = vld [vmem:[%s4] sm:$0xf]
    %v54 = vld [vmem:[%s3] sm:$0xf]
    %v55 = vld [vmem:[%s5] sm:$0xf]
    %v56 = vld [vmem:[#allocation5] sm:$0x3]
    %v57 = vld [vmem:[#allocation5 + $0x2] sm:$0x3]
    %v58 = vld [vmem:[#allocation5 + $0x4] sm:$0x3]
    %v59 = vld [vmem:[#allocation5 + $0x6] sm:$0x3]
    %v60 = vld [vmem:[#allocation5 + $0x8] sm:$0x3]
    %v61 = vld [vmem:[#allocation5 + $0xa] sm:$0x3]
    %v62 = vld [vmem:[#allocation5 + $0xc] sm:$0x3]
    %v63 = vld [vmem:[#allocation5 + $0xe] sm:$0x3]
    %v64 = vld [vmem:[#allocation5 + $0x10] sm:$0x3]
    %v65 = vld [vmem:[#allocation2] sm:$0xff]
    %v67 = vcombine.high %v65, %v65
    %69 = vrot.lane.b32.xlu0 %v65, 17
    %v70 = vpop.permute.xlu0 %69
    %71 = vrot.lane.b32.xlu0 %v67, 17
    %v72 = vpop.permute.xlu0 %71
    %v73 = vlaneseq
    %v74 = vand.u32 %v73, 127
    %vm75 = vcmp.lt.s32.totalorder %v74, 17
    %v76 = vsel %vm75, %v70, %v72
    %v77 = vsel %vm75, %v72, %v70
    %v79 = vlaneseq
    %v80 = vshrl.u32 %v79, 7
    %v81 = vsub.s32 0, %v80
    %v82 = vrot.slane %v56, %v81
    %v83 = vlaneseq
    %v84 = vshrl.u32 %v83, 7
    %v85 = vsub.s32 1, %v84
    %v86 = vrot.slane %v56, %v85
    %v89 = vmul.f32 %v77, %v82
    %v90 = vmul.f32 %v76, %v86
    %91 = vrot.lane.b32.xlu0 %v65, 16
    %v92 = vpop.permute.xlu0 %91
    %93 = vrot.lane.b32.xlu0 %v67, 16
    %v94 = vpop.permute.xlu0 %93
    %vm95 = vcmp.lt.s32.totalorder %v74, 16
    %v96 = vsel %vm95, %v92, %v94
    %v97 = vsel %vm95, %v94, %v92
    %v99 = vlaneseq
    %v100 = vshrl.u32 %v99, 7
    %v101 = vsub.s32 0, %v100
    %v102 = vrot.slane %v57, %v101
    %v103 = vlaneseq
    %v104 = vshrl.u32 %v103, 7
    %v105 = vsub.s32 1, %v104
    %v106 = vrot.slane %v57, %v105
    %v109 = vmul.f32 %v97, %v102
    %v110 = vmul.f32 %v96, %v106
    %111 = vrot.lane.b32.xlu0 %v65, 15
    %v112 = vpop.permute.xlu0 %111
    %113 = vrot.lane.b32.xlu0 %v67, 15
    %v114 = vpop.permute.xlu0 %113
    %vm115 = vcmp.lt.s32.totalorder %v74, 15
    %v116 = vsel %vm115, %v112, %v114
    %v117 = vsel %vm115, %v114, %v112
    %v119 = vlaneseq
    %v120 = vshrl.u32 %v119, 7
    %v121 = vsub.s32 0, %v120
    %v122 = vrot.slane %v58, %v121
    %v123 = vlaneseq
    %v124 = vshrl.u32 %v123, 7
    %v125 = vsub.s32 1, %v124
    %v126 = vrot.slane %v58, %v125
    %v129 = vmul.f32 %v117, %v122
    %v130 = vmul.f32 %v116, %v126
    %131 = vrot.lane.b32.xlu0 %v65, 1
    %v132 = vpop.permute.xlu0 %131
    %133 = vrot.lane.b32.xlu0 %v67, 1
    %v134 = vpop.permute.xlu0 %133
    %vm135 = vcmp.lt.s32.totalorder %v74, 1
    %v136 = vsel %vm135, %v132, %v134
    %v137 = vsel %vm135, %v134, %v132
    %v139 = vlaneseq
    %v140 = vshrl.u32 %v139, 7
    %v141 = vsub.s32 0, %v140
    %v142 = vrot.slane %v59, %v141
    %v143 = vlaneseq
    %v144 = vshrl.u32 %v143, 7
    %v145 = vsub.s32 1, %v144
    %v146 = vrot.slane %v59, %v145
    %v149 = vmul.f32 %v137, %v142
    %v150 = vmul.f32 %v136, %v146
    %v152 = vlaneseq
    %v153 = vshrl.u32 %v152, 7
    %v154 = vsub.s32 0, %v153
    %v155 = vrot.slane %v60, %v154
    %v156 = vlaneseq
    %v157 = vshrl.u32 %v156, 7
    %v158 = vsub.s32 1, %v157
    %v159 = vrot.slane %v60, %v158
    %v162 = vcombine.low %v155, %v159
    %v164 = vmul.f32 %v65, %v162
    %165 = vrot.lane.b32.xlu0 %v65, 127
    %v166 = vpop.permute.xlu0 %165
    %167 = vrot.lane.b32.xlu0 %v67, 127
    %v168 = vpop.permute.xlu0 %167
    %vm169 = vcmp.lt.s32.totalorder %v74, 127
    %v170 = vsel %vm169, %v166, %v168
    %v171 = vsel %vm169, %v168, %v166
    %v173 = vlaneseq
    %v174 = vshrl.u32 %v173, 7
    %v175 = vsub.s32 0, %v174
    %v176 = vrot.slane %v61, %v175
    %v177 = vlaneseq
    %v178 = vshrl.u32 %v177, 7
    %v179 = vsub.s32 1, %v178
    %v180 = vrot.slane %v61, %v179
    %v183 = vmul.f32 %v170, %v176
    %v184 = vmul.f32 %v171, %v180
    %185 = vrot.lane.b32.xlu0 %v65, 113
    %v186 = vpop.permute.xlu0 %185
    %187 = vrot.lane.b32.xlu0 %v67, 113
    %v188 = vpop.permute.xlu0 %187
    %vm189 = vcmp.lt.s32.totalorder %v74, 113
    %v190 = vsel %vm189, %v186, %v188
    %v191 = vsel %vm189, %v188, %v186
    %v193 = vlaneseq
    %v194 = vshrl.u32 %v193, 7
    %v195 = vsub.s32 0, %v194
    %v196 = vrot.slane %v62, %v195
    %v197 = vlaneseq
    %v198 = vshrl.u32 %v197, 7
    %v199 = vsub.s32 1, %v198
    %v200 = vrot.slane %v62, %v199
    %v203 = vmul.f32 %v190, %v196
    %v204 = vmul.f32 %v191, %v200
    %205 = vrot.lane.b32.xlu0 %v65, 112
    %v206 = vpop.permute.xlu0 %205
    %207 = vrot.lane.b32.xlu0 %v67, 112
    %v208 = vpop.permute.xlu0 %207
    %vm209 = vcmp.lt.s32.totalorder %v74, 112
    %v210 = vsel %vm209, %v206, %v208
    %v211 = vsel %vm209, %v208, %v206
    %v213 = vlaneseq
    %v214 = vshrl.u32 %v213, 7
    %v215 = vsub.s32 0, %v214
    %v216 = vrot.slane %v63, %v215
    %v217 = vlaneseq
    %v218 = vshrl.u32 %v217, 7
    %v219 = vsub.s32 1, %v218
    %v220 = vrot.slane %v63, %v219
    %v223 = vmul.f32 %v210, %v216
    %v224 = vmul.f32 %v211, %v220
    %225 = vrot.lane.b32.xlu0 %v65, 111
    %v226 = vpop.permute.xlu0 %225
    %227 = vrot.lane.b32.xlu0 %v67, 111
    %v228 = vpop.permute.xlu0 %227
    %vm229 = vcmp.lt.s32.totalorder %v74, 111
    %v230 = vsel %vm229, %v226, %v228
    %v231 = vsel %vm229, %v228, %v226
    %v233 = vlaneseq
    %v234 = vshrl.u32 %v233, 7
    %v235 = vsub.s32 0, %v234
    %v236 = vrot.slane %v64, %v235
    %v237 = vlaneseq
    %v238 = vshrl.u32 %v237, 7
    %v239 = vsub.s32 1, %v238
    %v240 = vrot.slane %v64, %v239
    %v243 = vmul.f32 %v230, %v236
    %v244 = vmul.f32 %v231, %v240
    %v247 = vrot.slane %v109, 4
    %v248 = vrot.slane %v110, 4
    %v253 = vrot.slane %v149, 4
    %v254 = vrot.slane %v150, 4
    %v258 = vcombine.high %v164, %v164
    %v262 = vrot.slane %v183, 4
    %v263 = vrot.slane %v184, 4
    %v268 = vrot.slane %v223, 4
    %v269 = vrot.slane %v224, 4
    %vm272 = vcmask 1043456
    %v273 = vsel %vm272, %v89, %v247
    %v274 = vsel %vm272, %v90, %v248
    %v275 = vsel %vm272, %v129, %v253
    %v276 = vsel %vm272, %v130, %v254
    %v277 = vsel %vm272, %v164, %v262
    %v278 = vsel %vm272, %v258, %v263
    %v279 = vsel %vm272, %v203, %v268
    %v280 = vsel %vm272, %v204, %v269
    %282 = vset.pattern.permute.xlu0 0
    %283 = vperm.xlu0 %282, %v54
    %v284 = vpop.permute.xlu0 %283
    %vm286 = vcmask 293888
    %v288 = vsel %vm286, %v52, 0
    %v291 = vsel %vm272, %v243, 0
    %v294 = vsel %vm272, %v244, 0
    %296 = vmatprep.subr.mxu0 %v274
    %297 = vmatpush1.msra.mxu0 %v273
    %298 = vmatprep.subr.mxu0 %v276
    %299 = vmatpush1.msra.mxu0 %v275
    %300 = vmatprep.subr.mxu0 %v278
    %301 = vmatpush1.msra.mxu0 %v277
    %302 = vmatprep.subr.mxu0 %v280
    %303 = vmatpush1.msra.mxu0 %v279
    %304 = vmatprep.subr.mxu0 %v294
    %305 = vmatpush1.msra.mxu0 %v291
    %306 = vmatprep.subr.mxu0 0.0
    %307 = vmatpush1.msra.mxu0 0.0
    %308 = vmatprep.subr.mxu0 0.0
    %309 = vmatpush1.msra.mxu0 0.0
    %310 = vmatprep.subr.mxu0 0.0
    %311 = vmatpush1.msra.mxu0 0.0
    %312 = vmatprep.subr.mxu0 0.0
    %313 = vmatpush1.msra.mxu0 0.0
    %314 = vmatprep.subr.mxu0 0.0
    %315 = vmatpush1.msra.mxu0 0.0
    %316 = vmatprep.subr.mxu0 0.0
    %317 = vmatpush1.msra.mxu0 0.0
    %318 = vmatprep.subr.mxu0 0.0
    %319 = vmatpush1.msra.mxu0 0.0
    %320 = vmatprep.subr.mxu0 0.0
    %321 = vmatpush1.msra.mxu0 0.0
    %322 = vmatprep.subr.mxu0 0.0
    %323 = vmatpush1.msra.mxu0 0.0
    %324 = vmatprep.subr.mxu0 0.0
    %325 = vmatpush1.msra.mxu0 0.0
    %326 = vmatprep.subr.mxu0 0.0
    %327 = vmatpush1.msra.mxu0 0.0
    %328 = vmatprep.subr.mxu0 0.0
    %329 = vmatpush1.msra.mxu0 0.0
    %330 = vmatprep.subr.mxu0 0.0
    %331 = vmatpush1.msra.mxu0 0.0
    %332 = vmatprep.subr.mxu0 0.0
    %333 = vmatpush1.msra.mxu0 0.0
    %334 = vmatprep.subr.mxu0 0.0
    %335 = vmatpush1.msra.mxu0 0.0
    %336 = vmatprep.subr.mxu0 0.0
    %337 = vmatpush1.msra.mxu0 0.0
    %338 = vmatprep.subr.mxu0 0.0
    %339 = vmatpush1.msra.mxu0 0.0
    %340 = vmatprep.subr.mxu0 0.0
    %341 = vmatpush1.msra.mxu0 0.0
    %342 = vmatprep.subr.mxu0 0.0
    %343 = vmatpush1.msra.mxu0 0.0
    %344 = vmatprep.subr.mxu0 0.0
    %345 = vmatpush1.msra.mxu0 0.0
    %346 = vmatprep.subr.mxu0 0.0
    %347 = vmatpush1.msra.mxu0 0.0
    %348 = vmatprep.subr.mxu0 0.0
    %349 = vmatpush1.msra.mxu0 0.0
    %350 = vmatprep.subr.mxu0 0.0
    %351 = vmatpush1.msra.mxu0 0.0
    %352 = vmatprep.subr.mxu0 0.0
    %353 = vmatpush1.msra.mxu0 0.0
    %354 = vmatprep.subr.mxu0 0.0
    %355 = vmatpush1.msra.mxu0 0.0
    %356 = vmatprep.subr.mxu0 0.0
    %357 = vmatpush1.msra.mxu0 0.0
    %358 = vmatprep.subr.mxu0 0.0
    %359 = vmatpush1.msra.mxu0 0.0
    %360 = vmatprep.mubr.f32.mxu0 0.0
    %361 = vmatmul.mubr.f32.gmra.mrb[0].mxu0 %v288
    %v362 = vpop.f32.mrb[0].mxu0
    %v363 = vadd.f32 %v284, %v362
    %v364 = vpop.f32.mrb[0].mxu0
    %v365 = vadd.f32 %v284, %v364
    %366 = vdwg.mxu0
    %v367 = vmax.f32 %v363, 0.0
    %v368 = vmax.f32 %v365, 0.0
    %369 = vrot.lane.b32.xlu0 %v367, 17
    %v370 = vpop.permute.xlu0 %369
    %371 = vrot.lane.b32.xlu0 %v368, 17
    %v372 = vpop.permute.xlu0 %371
    %v373 = vsel %vm75, %v370, %v372
    %v374 = vsel %vm75, %v372, %v370
    %v375 = vmul.f32 %v374, %v82
    %v376 = vmul.f32 %v373, %v86
    %377 = vrot.lane.b32.xlu0 %v367, 16
    %v378 = vpop.permute.xlu0 %377
    %379 = vrot.lane.b32.xlu0 %v368, 16
    %v380 = vpop.permute.xlu0 %379
    %v381 = vsel %vm95, %v378, %v380
    %v382 = vsel %vm95, %v380, %v378
    %v383 = vmul.f32 %v382, %v102
    %v384 = vmul.f32 %v381, %v106
    %385 = vrot.lane.b32.xlu0 %v367, 15
    %v386 = vpop.permute.xlu0 %385
    %387 = vrot.lane.b32.xlu0 %v368, 15
    %v388 = vpop.permute.xlu0 %387
    %v389 = vsel %vm115, %v386, %v388
    %v390 = vsel %vm115, %v388, %v386
    %v391 = vmul.f32 %v390, %v122
    %v392 = vmul.f32 %v389, %v126
    %393 = vrot.lane.b32.xlu0 %v367, 1
    %v394 = vpop.permute.xlu0 %393
    %395 = vrot.lane.b32.xlu0 %v368, 1
    %v396 = vpop.permute.xlu0 %395
    %v397 = vsel %vm135, %v394, %v396
    %v398 = vsel %vm135, %v396, %v394
    %v399 = vmul.f32 %v398, %v142
    %v400 = vmul.f32 %v397, %v146
    %v401 = vmul.f32 %v367, %v155
    %v402 = vmul.f32 %v368, %v159
    %403 = vrot.lane.b32.xlu0 %v367, 127
    %v404 = vpop.permute.xlu0 %403
    %405 = vrot.lane.b32.xlu0 %v368, 127
    %v406 = vpop.permute.xlu0 %405
    %v407 = vsel %vm169, %v404, %v406
    %v408 = vsel %vm169, %v406, %v404
    %v409 = vmul.f32 %v407, %v176
    %v410 = vmul.f32 %v408, %v180
    %411 = vrot.lane.b32.xlu0 %v367, 113
    %v412 = vpop.permute.xlu0 %411
    %413 = vrot.lane.b32.xlu0 %v368, 113
    %v414 = vpop.permute.xlu0 %413
    %v415 = vsel %vm189, %v412, %v414
    %v416 = vsel %vm189, %v414, %v412
    %v417 = vmul.f32 %v415, %v196
    %v418 = vmul.f32 %v416, %v200
    %419 = vrot.lane.b32.xlu0 %v367, 112
    %v420 = vpop.permute.xlu0 %419
    %421 = vrot.lane.b32.xlu0 %v368, 112
    %v422 = vpop.permute.xlu0 %421
    %v423 = vsel %vm209, %v420, %v422
    %v424 = vsel %vm209, %v422, %v420
    %v425 = vmul.f32 %v423, %v216
    %v426 = vmul.f32 %v424, %v220
    %427 = vrot.lane.b32.xlu0 %v367, 111
    %v428 = vpop.permute.xlu0 %427
    %429 = vrot.lane.b32.xlu0 %v368, 111
    %v430 = vpop.permute.xlu0 %429
    %v431 = vsel %vm229, %v428, %v430
    %v432 = vsel %vm229, %v430, %v428
    %v433 = vmul.f32 %v431, %v236
    %v434 = vmul.f32 %v432, %v240
    %v437 = vrot.slane %v383, 4
    %v438 = vrot.slane %v384, 4
    %v443 = vrot.slane %v399, 4
    %v444 = vrot.slane %v400, 4
    %v449 = vrot.slane %v409, 4
    %v450 = vrot.slane %v410, 4
    %v455 = vrot.slane %v425, 4
    %v456 = vrot.slane %v426, 4
    %v459 = vsel %vm272, %v375, %v437
    %v460 = vsel %vm272, %v376, %v438
    %v461 = vsel %vm272, %v391, %v443
    %v462 = vsel %vm272, %v392, %v444
    %v463 = vsel %vm272, %v401, %v449
    %v464 = vsel %vm272, %v402, %v450
    %v465 = vsel %vm272, %v417, %v455
    %v466 = vsel %vm272, %v418, %v456
    %468 = vset.pattern.permute.xlu0 0
    %469 = vperm.xlu0 %468, %v55
    %v470 = vpop.permute.xlu0 %469
    %v473 = vsel %vm286, %v53, 0
    %v476 = vsel %vm272, %v433, 0
    %v479 = vsel %vm272, %v434, 0
    %481 = vmatprep.subr.mxu0 %v460
    %482 = vmatpush1.msra.mxu0 %v459
    %483 = vmatprep.subr.mxu0 %v462
    %484 = vmatpush1.msra.mxu0 %v461
    %485 = vmatprep.subr.mxu0 %v464
    %486 = vmatpush1.msra.mxu0 %v463
    %487 = vmatprep.subr.mxu0 %v466
    %488 = vmatpush1.msra.mxu0 %v465
    %489 = vmatprep.subr.mxu0 %v479
    %490 = vmatpush1.msra.mxu0 %v476
    %491 = vmatprep.subr.mxu0 0.0
    %492 = vmatpush1.msra.mxu0 0.0
    %493 = vmatprep.subr.mxu0 0.0
    %494 = vmatpush1.msra.mxu0 0.0
    %495 = vmatprep.subr.mxu0 0.0
    %496 = vmatpush1.msra.mxu0 0.0
    %497 = vmatprep.subr.mxu0 0.0
    %498 = vmatpush1.msra.mxu0 0.0
    %499 = vmatprep.subr.mxu0 0.0
    %500 = vmatpush1.msra.mxu0 0.0
    %501 = vmatprep.subr.mxu0 0.0
    %502 = vmatpush1.msra.mxu0 0.0
    %503 = vmatprep.subr.mxu0 0.0
    %504 = vmatpush1.msra.mxu0 0.0
    %505 = vmatprep.subr.mxu0 0.0
    %506 = vmatpush1.msra.mxu0 0.0
    %507 = vmatprep.subr.mxu0 0.0
    %508 = vmatpush1.msra.mxu0 0.0
    %509 = vmatprep.subr.mxu0 0.0
    %510 = vmatpush1.msra.mxu0 0.0
    %511 = vmatprep.subr.mxu0 0.0
    %512 = vmatpush1.msra.mxu0 0.0
    %513 = vmatprep.subr.mxu0 0.0
    %514 = vmatpush1.msra.mxu0 0.0
    %515 = vmatprep.subr.mxu0 0.0
    %516 = vmatpush1.msra.mxu0 0.0
    %517 = vmatprep.subr.mxu0 0.0
    %518 = vmatpush1.msra.mxu0 0.0
    %519 = vmatprep.subr.mxu0 0.0
    %520 = vmatpush1.msra.mxu0 0.0
    %521 = vmatprep.subr.mxu0 0.0
    %522 = vmatpush1.msra.mxu0 0.0
    %523 = vmatprep.subr.mxu0 0.0
    %524 = vmatpush1.msra.mxu0 0.0
    %525 = vmatprep.subr.mxu0 0.0
    %526 = vmatpush1.msra.mxu0 0.0
    %527 = vmatprep.subr.mxu0 0.0
    %528 = vmatpush1.msra.mxu0 0.0
    %529 = vmatprep.subr.mxu0 0.0
    %530 = vmatpush1.msra.mxu0 0.0
    %531 = vmatprep.subr.mxu0 0.0
    %532 = vmatpush1.msra.mxu0 0.0
    %533 = vmatprep.subr.mxu0 0.0
    %534 = vmatpush1.msra.mxu0 0.0
    %535 = vmatprep.subr.mxu0 0.0
    %536 = vmatpush1.msra.mxu0 0.0
    %537 = vmatprep.subr.mxu0 0.0
    %538 = vmatpush1.msra.mxu0 0.0
    %539 = vmatprep.subr.mxu0 0.0
    %540 = vmatpush1.msra.mxu0 0.0
    %541 = vmatprep.subr.mxu0 0.0
    %542 = vmatpush1.msra.mxu0 0.0
    %543 = vmatprep.subr.mxu0 0.0
    %544 = vmatpush1.msra.mxu0 0.0
    %545 = vmatprep.mubr.f32.mxu0 0.0
    %546 = vmatmul.mubr.f32.gmra.mrb[0].mxu0 %v473
    %v547 = vpop.f32.mrb[0].mxu0
    %v548 = vadd.f32 %v470, %v547
    %v549 = vpop.f32.mrb[0].mxu0
    %v550 = vadd.f32 %v470, %v549
    %551 = vdwg.mxu0
    %v552 = vadd.f32 %v548, %v65
    %v553 = vadd.f32 %v550, %v67
    %v556 = vcombine.low %v552, %v553
    %558 = vst [vmem:[#allocation7] sm:$0xff] %v556
    %s559 = scalar_lea.vmem [#allocation2], 8
    %v560 = vld [vmem:[%s559] sm:$0xff]
    %v562 = vcombine.high %v560, %v560
    %564 = vrot.lane.b32.xlu0 %v560, 17
    %v565 = vpop.permute.xlu0 %564
    %566 = vrot.lane.b32.xlu0 %v562, 17
    %v567 = vpop.permute.xlu0 %566
    %v568 = vsel %vm75, %v565, %v567
    %v569 = vsel %vm75, %v567, %v565
    %v570 = vmul.f32 %v569, %v82
    %v571 = vmul.f32 %v568, %v86
    %572 = vrot.lane.b32.xlu0 %v560, 16
    %v573 = vpop.permute.xlu0 %572
    %574 = vrot.lane.b32.xlu0 %v562, 16
    %v575 = vpop.permute.xlu0 %574
    %v576 = vsel %vm95, %v573, %v575
    %v577 = vsel %vm95, %v575, %v573
    %v578 = vmul.f32 %v577, %v102
    %v579 = vmul.f32 %v576, %v106
    %580 = vrot.lane.b32.xlu0 %v560, 15
    %v581 = vpop.permute.xlu0 %580
    %582 = vrot.lane.b32.xlu0 %v562, 15
    %v583 = vpop.permute.xlu0 %582
    %v584 = vsel %vm115, %v581, %v583
    %v585 = vsel %vm115, %v583, %v581
    %v586 = vmul.f32 %v585, %v122
    %v587 = vmul.f32 %v584, %v126
    %588 = vrot.lane.b32.xlu0 %v560, 1
    %v589 = vpop.permute.xlu0 %588
    %590 = vrot.lane.b32.xlu0 %v562, 1
    %v591 = vpop.permute.xlu0 %590
    %v592 = vsel %vm135, %v589, %v591
    %v593 = vsel %vm135, %v591, %v589
    %v594 = vmul.f32 %v593, %v142
    %v595 = vmul.f32 %v592, %v146
    %v596 = vmul.f32 %v560, %v162
    %597 = vrot.lane.b32.xlu0 %v560, 127
    %v598 = vpop.permute.xlu0 %597
    %599 = vrot.lane.b32.xlu0 %v562, 127
    %v600 = vpop.permute.xlu0 %599
    %v601 = vsel %vm169, %v598, %v600
    %v602 = vsel %vm169, %v600, %v598
    %v603 = vmul.f32 %v601, %v176
    %v604 = vmul.f32 %v602, %v180
    %605 = vrot.lane.b32.xlu0 %v560, 113
    %v606 = vpop.permute.xlu0 %605
    %607 = vrot.lane.b32.xlu0 %v562, 113
    %v608 = vpop.permute.xlu0 %607
    %v609 = vsel %vm189, %v606, %v608
    %v610 = vsel %vm189, %v608, %v606
    %v611 = vmul.f32 %v609, %v196
    %v612 = vmul.f32 %v610, %v200
    %613 = vrot.lane.b32.xlu0 %v560, 112
    %v614 = vpop.permute.xlu0 %613
    %615 = vrot.lane.b32.xlu0 %v562, 112
    %v616 = vpop.permute.xlu0 %615
    %v617 = vsel %vm209, %v614, %v616
    %v618 = vsel %vm209, %v616, %v614
    %v619 = vmul.f32 %v617, %v216
    %v620 = vmul.f32 %v618, %v220
    %621 = vrot.lane.b32.xlu0 %v560, 111
    %v622 = vpop.permute.xlu0 %621
    %623 = vrot.lane.b32.xlu0 %v562, 111
    %v624 = vpop.permute.xlu0 %623
    %v625 = vsel %vm229, %v622, %v624
    %v626 = vsel %vm229, %v624, %v622
    %v627 = vmul.f32 %v625, %v236
    %v628 = vmul.f32 %v626, %v240
    %v631 = vrot.slane %v578, 4
    %v632 = vrot.slane %v579, 4
    %v637 = vrot.slane %v594, 4
    %v638 = vrot.slane %v595, 4
    %v642 = vcombine.high %v596, %v596
    %v646 = vrot.slane %v603, 4
    %v647 = vrot.slane %v604, 4
    %v652 = vrot.slane %v619, 4
    %v653 = vrot.slane %v620, 4
    %v656 = vsel %vm272, %v570, %v631
    %v657 = vsel %vm272, %v571, %v632
    %v658 = vsel %vm272, %v586, %v637
    %v659 = vsel %vm272, %v587, %v638
    %v660 = vsel %vm272, %v596, %v646
    %v661 = vsel %vm272, %v642, %v647
    %v662 = vsel %vm272, %v611, %v652
    %v663 = vsel %vm272, %v612, %v653
    %v665 = vsel %vm272, %v627, 0
    %v668 = vsel %vm272, %v628, 0
    %670 = vmatprep.subr.mxu0 %v657
    %671 = vmatpush1.msra.mxu0 %v656
    %672 = vmatprep.subr.mxu0 %v659
    %673 = vmatpush1.msra.mxu0 %v658
    %674 = vmatprep.subr.mxu0 %v661
    %675 = vmatpush1.msra.mxu0 %v660
    %676 = vmatprep.subr.mxu0 %v663
    %677 = vmatpush1.msra.mxu0 %v662
    %678 = vmatprep.subr.mxu0 %v668
    %679 = vmatpush1.msra.mxu0 %v665
    %680 = vmatprep.subr.mxu0 0.0
    %681 = vmatpush1.msra.mxu0 0.0
    %682 = vmatprep.subr.mxu0 0.0
    %683 = vmatpush1.msra.mxu0 0.0
    %684 = vmatprep.subr.mxu0 0.0
    %685 = vmatpush1.msra.mxu0 0.0
    %686 = vmatprep.subr.mxu0 0.0
    %687 = vmatpush1.msra.mxu0 0.0
    %688 = vmatprep.subr.mxu0 0.0
    %689 = vmatpush1.msra.mxu0 0.0
    %690 = vmatprep.subr.mxu0 0.0
    %691 = vmatpush1.msra.mxu0 0.0
    %692 = vmatprep.subr.mxu0 0.0
    %693 = vmatpush1.msra.mxu0 0.0
    %694 = vmatprep.subr.mxu0 0.0
    %695 = vmatpush1.msra.mxu0 0.0
    %696 = vmatprep.subr.mxu0 0.0
    %697 = vmatpush1.msra.mxu0 0.0
    %698 = vmatprep.subr.mxu0 0.0
    %699 = vmatpush1.msra.mxu0 0.0
    %700 = vmatprep.subr.mxu0 0.0
    %701 = vmatpush1.msra.mxu0 0.0
    %702 = vmatprep.subr.mxu0 0.0
    %703 = vmatpush1.msra.mxu0 0.0
    %704 = vmatprep.subr.mxu0 0.0
    %705 = vmatpush1.msra.mxu0 0.0
    %706 = vmatprep.subr.mxu0 0.0
    %707 = vmatpush1.msra.mxu0 0.0
    %708 = vmatprep.subr.mxu0 0.0
    %709 = vmatpush1.msra.mxu0 0.0
    %710 = vmatprep.subr.mxu0 0.0
    %711 = vmatpush1.msra.mxu0 0.0
    %712 = vmatprep.subr.mxu0 0.0
    %713 = vmatpush1.msra.mxu0 0.0
    %714 = vmatprep.subr.mxu0 0.0
    %715 = vmatpush1.msra.mxu0 0.0
    %716 = vmatprep.subr.mxu0 0.0
    %717 = vmatpush1.msra.mxu0 0.0
    %718 = vmatprep.subr.mxu0 0.0
    %719 = vmatpush1.msra.mxu0 0.0
    %720 = vmatprep.subr.mxu0 0.0
    %721 = vmatpush1.msra.mxu0 0.0
    %722 = vmatprep.subr.mxu0 0.0
    %723 = vmatpush1.msra.mxu0 0.0
    %724 = vmatprep.subr.mxu0 0.0
    %725 = vmatpush1.msra.mxu0 0.0
    %726 = vmatprep.subr.mxu0 0.0
    %727 = vmatpush1.msra.mxu0 0.0
    %728 = vmatprep.subr.mxu0 0.0
    %729 = vmatpush1.msra.mxu0 0.0
    %730 = vmatprep.subr.mxu0 0.0
    %731 = vmatpush1.msra.mxu0 0.0
    %732 = vmatprep.subr.mxu0 0.0
    %733 = vmatpush1.msra.mxu0 0.0
    %734 = vmatprep.mubr.f32.mxu0 0.0
    %735 = vmatmul.mubr.f32.gmra.mrb[0].mxu0 %v288
    %v736 = vpop.f32.mrb[0].mxu0
    %v737 = vadd.f32 %v284, %v736
    %v738 = vpop.f32.mrb[0].mxu0
    %v739 = vadd.f32 %v284, %v738
    %740 = vdwg.mxu0
    %v741 = vmax.f32 %v737, 0.0
    %v742 = vmax.f32 %v739, 0.0
    %743 = vrot.lane.b32.xlu0 %v741, 17
    %v744 = vpop.permute.xlu0 %743
    %745 = vrot.lane.b32.xlu0 %v742, 17
    %v746 = vpop.permute.xlu0 %745
    %v747 = vsel %vm75, %v744, %v746
    %v748 = vsel %vm75, %v746, %v744
    %v749 = vmul.f32 %v748, %v82
    %v750 = vmul.f32 %v747, %v86
    %751 = vrot.lane.b32.xlu0 %v741, 16
    %v752 = vpop.permute.xlu0 %751
    %753 = vrot.lane.b32.xlu0 %v742, 16
    %v754 = vpop.permute.xlu0 %753
    %v755 = vsel %vm95, %v752, %v754
    %v756 = vsel %vm95, %v754, %v752
    %v757 = vmul.f32 %v756, %v102
    %v758 = vmul.f32 %v755, %v106
    %759 = vrot.lane.b32.xlu0 %v741, 15
    %v760 = vpop.permute.xlu0 %759
    %761 = vrot.lane.b32.xlu0 %v742, 15
    %v762 = vpop.permute.xlu0 %761
    %v763 = vsel %vm115, %v760, %v762
    %v764 = vsel %vm115, %v762, %v760
    %v765 = vmul.f32 %v764, %v122
    %v766 = vmul.f32 %v763, %v126
    %767 = vrot.lane.b32.xlu0 %v741, 1
    %v768 = vpop.permute.xlu0 %767
    %769 = vrot.lane.b32.xlu0 %v742, 1
    %v770 = vpop.permute.xlu0 %769
    %v771 = vsel %vm135, %v768, %v770
    %v772 = vsel %vm135, %v770, %v768
    %v773 = vmul.f32 %v772, %v142
    %v774 = vmul.f32 %v771, %v146
    %v775 = vmul.f32 %v741, %v155
    %v776 = vmul.f32 %v742, %v159
    %777 = vrot.lane.b32.xlu0 %v741, 127
    %v778 = vpop.permute.xlu0 %777
    %779 = vrot.lane.b32.xlu0 %v742, 127
    %v780 = vpop.permute.xlu0 %779
    %v781 = vsel %vm169, %v778, %v780
    %v782 = vsel %vm169, %v780, %v778
    %v783 = vmul.f32 %v781, %v176
    %v784 = vmul.f32 %v782, %v180
    %785 = vrot.lane.b32.xlu0 %v741, 113
    %v786 = vpop.permute.xlu0 %785
    %787 = vrot.lane.b32.xlu0 %v742, 113
    %v788 = vpop.permute.xlu0 %787
    %v789 = vsel %vm189, %v786, %v788
    %v790 = vsel %vm189, %v788, %v786
    %v791 = vmul.f32 %v789, %v196
    %v792 = vmul.f32 %v790, %v200
    %793 = vrot.lane.b32.xlu0 %v741, 112
    %v794 = vpop.permute.xlu0 %793
    %795 = vrot.lane.b32.xlu0 %v742, 112
    %v796 = vpop.permute.xlu0 %795
    %v797 = vsel %vm209, %v794, %v796
    %v798 = vsel %vm209, %v796, %v794
    %v799 = vmul.f32 %v797, %v216
    %v800 = vmul.f32 %v798, %v220
    %801 = vrot.lane.b32.xlu0 %v741, 111
    %v802 = vpop.permute.xlu0 %801
    %803 = vrot.lane.b32.xlu0 %v742, 111
    %v804 = vpop.permute.xlu0 %803
    %v805 = vsel %vm229, %v802, %v804
    %v806 = vsel %vm229, %v804, %v802
    %v807 = vmul.f32 %v805, %v236
    %v808 = vmul.f32 %v806, %v240
    %v811 = vrot.slane %v757, 4
    %v812 = vrot.slane %v758, 4
    %v817 = vrot.slane %v773, 4
    %v818 = vrot.slane %v774, 4
    %v823 = vrot.slane %v783, 4
    %v824 = vrot.slane %v784, 4
    %v829 = vrot.slane %v799, 4
    %v830 = vrot.slane %v800, 4
    %v833 = vsel %vm272, %v749, %v811
    %v834 = vsel %vm272, %v750, %v812
    %v835 = vsel %vm272, %v765, %v817
    %v836 = vsel %vm272, %v766, %v818
    %v837 = vsel %vm272, %v775, %v823
    %v838 = vsel %vm272, %v776, %v824
    %v839 = vsel %vm272, %v791, %v829
    %v840 = vsel %vm272, %v792, %v830
    %v842 = vsel %vm272, %v807, 0
    %v845 = vsel %vm272, %v808, 0
    %847 = vmatprep.subr.mxu0 %v834
    %848 = vmatpush1.msra.mxu0 %v833
    %849 = vmatprep.subr.mxu0 %v836
    %850 = vmatpush1.msra.mxu0 %v835
    %851 = vmatprep.subr.mxu0 %v838
    %852 = vmatpush1.msra.mxu0 %v837
    %853 = vmatprep.subr.mxu0 %v840
    %854 = vmatpush1.msra.mxu0 %v839
    %855 = vmatprep.subr.mxu0 %v845
    %856 = vmatpush1.msra.mxu0 %v842
    %857 = vmatprep.subr.mxu0 0.0
    %858 = vmatpush1.msra.mxu0 0.0
    %859 = vmatprep.subr.mxu0 0.0
    %860 = vmatpush1.msra.mxu0 0.0
    %861 = vmatprep.subr.mxu0 0.0
    %862 = vmatpush1.msra.mxu0 0.0
    %863 = vmatprep.subr.mxu0 0.0
    %864 = vmatpush1.msra.mxu0 0.0
    %865 = vmatprep.subr.mxu0 0.0
    %866 = vmatpush1.msra.mxu0 0.0
    %867 = vmatprep.subr.mxu0 0.0
    %868 = vmatpush1.msra.mxu0 0.0
    %869 = vmatprep.subr.mxu0 0.0
    %870 = vmatpush1.msra.mxu0 0.0
    %871 = vmatprep.subr.mxu0 0.0
    %872 = vmatpush1.msra.mxu0 0.0
    %873 = vmatprep.subr.mxu0 0.0
    %874 = vmatpush1.msra.mxu0 0.0
    %875 = vmatprep.subr.mxu0 0.0
    %876 = vmatpush1.msra.mxu0 0.0
    %877 = vmatprep.subr.mxu0 0.0
    %878 = vmatpush1.msra.mxu0 0.0
    %879 = vmatprep.subr.mxu0 0.0
    %880 = vmatpush1.msra.mxu0 0.0
    %881 = vmatprep.subr.mxu0 0.0
    %882 = vmatpush1.msra.mxu0 0.0
    %883 = vmatprep.subr.mxu0 0.0
    %884 = vmatpush1.msra.mxu0 0.0
    %885 = vmatprep.subr.mxu0 0.0
    %886 = vmatpush1.msra.mxu0 0.0
    %887 = vmatprep.subr.mxu0 0.0
    %888 = vmatpush1.msra.mxu0 0.0
    %889 = vmatprep.subr.mxu0 0.0
    %890 = vmatpush1.msra.mxu0 0.0
    %891 = vmatprep.subr.mxu0 0.0
    %892 = vmatpush1.msra.mxu0 0.0
    %893 = vmatprep.subr.mxu0 0.0
    %894 = vmatpush1.msra.mxu0 0.0
    %895 = vmatprep.subr.mxu0 0.0
    %896 = vmatpush1.msra.mxu0 0.0
    %897 = vmatprep.subr.mxu0 0.0
    %898 = vmatpush1.msra.mxu0 0.0
    %899 = vmatprep.subr.mxu0 0.0
    %900 = vmatpush1.msra.mxu0 0.0
    %901 = vmatprep.subr.mxu0 0.0
    %902 = vmatpush1.msra.mxu0 0.0
    %903 = vmatprep.subr.mxu0 0.0
    %904 = vmatpush1.msra.mxu0 0.0
    %905 = vmatprep.subr.mxu0 0.0
    %906 = vmatpush1.msra.mxu0 0.0
    %907 = vmatprep.subr.mxu0 0.0
    %908 = vmatpush1.msra.mxu0 0.0
    %909 = vmatprep.subr.mxu0 0.0
    %910 = vmatpush1.msra.mxu0 0.0
    %911 = vmatprep.mubr.f32.mxu0 0.0
    %912 = vmatmul.mubr.f32.gmra.mrb[0].mxu0 %v473
    %v913 = vpop.f32.mrb[0].mxu0
    %v914 = vadd.f32 %v470, %v913
    %v915 = vpop.f32.mrb[0].mxu0
    %v916 = vadd.f32 %v470, %v915
    %917 = vdwg.mxu0
    %v918 = vadd.f32 %v914, %v560
    %v919 = vadd.f32 %v916, %v562
    %v922 = vcombine.low %v918, %v919
    %s924 = scalar_lea.vmem [#allocation7], 8
    %925 = vst [vmem:[%s924] sm:$0xff] %v922
    // Predicated region
    $region34: #{tpu_custom_call.1} parent=1 // pred_check
      _
    $region35: #{tpu_custom_call.1} parent=1 // pred_check_branch
      %927 = sbr.rel (0) target = $region37
    $region36: #{tpu_custom_call.1} parent=1 // pred_region
      %s929 = ssub.s32 256, 256
      %930 = vsyncadd [#allocation4], %s929
      %s931 = sshll.u32 [#allocation7], 4
      %s932 = int_to_ptr.vmem [resolvable:$true] %s931
      %937 = dma.vmem_to_hbm [thread:$0]  %s932, 256, %s6, [#allocation4], 128, 128, 8
    $region37: #{tpu_custom_call.1} parent=1 // pred_fallthru
      _
    // Predicated region
    $region38: #{tpu_custom_call.1} parent=1 // pred_check
      _
    $region39: #{tpu_custom_call.1} parent=1 // pred_check_branch
      %939 = sbr.rel (0) target = $region41
    $region40: #{tpu_custom_call.1} parent=1 // pred_region
      %940 = dma.done [#allocation4], 256
    $region41: #{tpu_custom_call.1} parent=1 // pred_fallthru
      _
    %941 = vsyncpa [#allocation3], 1
    %942 = vsyncpa [#allocation6], 1
    %943 = vsyncpa [#allocation4], 1

</llo_original>
